<compile_context>
chip_gen: v6e
topology: v6e:2x2x1
jax: 0.10.0
libtpu: 0.0.40
codegen_flags: <defaults>
</compile_context>

<pallas_src>
import math
import functools

import jax
import jax.numpy as jnp
from jax.experimental import pallas as pl
from jax.experimental.pallas import tpu as pltpu


def _round_up(x: int, m: int) -> int:
    return ((x + m - 1) // m) * m


def _pad_and_pack(emb_dim: int):
    """Column padding for the table and how many tokens pack into one 128-lane row."""
    if emb_dim >= 128:
        return _round_up(emb_dim, 128), 1
    d_pad = 8
    while d_pad < emb_dim:
        d_pad *= 2
    return d_pad, 128 // d_pad            # d_pad divides 128 -> pack * d_pad == 128


def prepare_index_text_encoder_table(weight: jax.Array, d_model: int) -> jax.Array:
    """One-time (parameter-init) prep: cast to f32, zero-pad columns to d_pad,
    and fold the sqrt(d_model) scale into the table (bit-exact vs post-scaling)."""
    n_tokens, emb_dim = weight.shape
    assert emb_dim == d_model - 1
    d_pad, _ = _pad_and_pack(emb_dim)
    w = weight.astype(jnp.float32) * math.sqrt(d_model)
    return jnp.pad(w, ((0, 0), (0, d_pad - emb_dim)))


def _embed_gather_kernel(ids_ref, w_ref, o_ref, *, block_tokens, rows_per_block, pack):
    """Gather `block_tokens` embedding rows for this grid step.

    ids_ref: SMEM (n_pad,) int32            -- token ids (scalar prefetch)
    w_ref:   VMEM (n_tokens, d_pad) f32     -- pre-scaled table, resident (constant block)
    o_ref:   VMEM (rows_per_block, 128) f32 -- output block; each row packs `pack` tokens
    """
    base = pl.program_id(0) * block_tokens

    def write_row(row, carry):
        parts = []
        for p in range(pack):                       # static unroll; pack is small (<=16)
            tok = ids_ref[base + row * pack + p]    # scalar SMEM read
            parts.append(w_ref[pl.ds(tok, 1), :])   # (1, d_pad) dynamic VMEM slice
        packed = parts[0] if pack == 1 else jnp.concatenate(parts, axis=1)
        o_ref[pl.ds(row, 1), :] = packed            # one unmasked lane-dense store
        return carry

    jax.lax.fori_loop(0, rows_per_block, write_row, 0,
                      unroll=min(8, rows_per_block))


def index_text_encoder_forward(src: jax.Array, table: jax.Array, d_model: int, *,
                               block_tokens: int = 1024) -> jax.Array:
    """src: [seq_len, batch] int ids; table: output of prepare_index_text_encoder_table.

    Returns [seq_len, batch, d_model-1] f32 == Embedding(src) * sqrt(d_model).
    """
    seq_len, batch = src.shape
    n_tokens, d_pad_t = table.shape
    emb_dim = d_model - 1
    d_pad, pack = _pad_and_pack(emb_dim)
    assert d_pad_t == d_pad, "table must come from prepare_index_text_encoder_table"
    lane_w = d_pad * pack                 # multiple of 128 -> unmasked lane-dense stores

    n = seq_len * batch
    sub_align = 8 * pack                  # keeps rows_per_block a multiple of 8
    block_tokens = max(sub_align, min(block_tokens, _round_up(n, sub_align)))
    block_tokens = _round_up(block_tokens, sub_align)
    rows_per_block = block_tokens // pack
    n_pad = _round_up(n, block_tokens)
    grid = (n_pad // block_tokens,)

    # Token ids -> SMEM scalar prefetch (clamped; padded tail gathers row 0, sliced off).
    # TODO(synk): for very large seq_len*batch (>~256K tokens) switch ids to a per-block
    # SMEM BlockSpec operand instead of whole-sequence scalar prefetch.
    ids = jnp.clip(src.reshape(n).astype(jnp.int32), 0, n_tokens - 1)
    if n_pad != n:
        ids = jnp.pad(ids, (0, n_pad - n))

    # VMEM budget: resident table (+ possible double buffer) + double-buffered out block.
    table_vmem = _round_up(n_tokens, 8) * d_pad * 4
    vmem_est = 2 * table_vmem + 2 * rows_per_block * lane_w * 4 + (1 << 20)
    compiler_kwargs = dict(dimension_semantics=("parallel",))
    if vmem_est > (30 << 20):
        if vmem_est > (56 << 20):
            # TODO(synk): double-buffered HBM-gather fallback for tables that cannot stay
            # VMEM-resident (v7x has only 64 MiB VMEM per TensorCore).
            raise NotImplementedError("embedding table too large for VMEM-resident gather")
        compiler_kwargs["vmem_limit_bytes"] = int(min(vmem_est + (2 << 20), 60 << 20))

    kernel = functools.partial(_embed_gather_kernel,
                               block_tokens=block_tokens,
                               rows_per_block=rows_per_block,
                               pack=pack)

    out_packed = pl.pallas_call(
        kernel,
        out_shape=jax.ShapeDtypeStruct((n_pad // pack, lane_w), jnp.float32),
        grid_spec=pltpu.PrefetchScalarGridSpec(
            num_scalar_prefetch=1,
            grid=grid,
            # Table: full array as one block, constant index -> loaded into VMEM once.
            in_specs=[pl.BlockSpec((n_tokens, d_pad), lambda i, ids_ref: (0, 0))],
            out_specs=pl.BlockSpec((rows_per_block, lane_w), lambda i, ids_ref: (i, 0)),
        ),
        compiler_params=pltpu.CompilerParams(**compiler_kwargs),
    )(ids, table)

    # Un-pack: each 128-lane row holds `pack` consecutive tokens' d_pad-wide embeddings.
    out = out_packed.reshape(n_pad, d_pad)[:n, :emb_dim]
    return out.reshape(seq_len, batch, emb_dim)


if __name__ == "__main__":
    # Module hyperparameters (small, synthetic).
    n_tokens = 50
    d_model = 32
    init_range = 0.1
    seq_len, batch = 8, 2

    key = jax.random.PRNGKey(0)
    k_w, k_src, k_src2 = jax.random.split(key, 3)

    # Deterministic "uniform_(-init_range, init_range)" init of the Embedding weight.
    weight = jax.random.uniform(
        k_w, (n_tokens, d_model - 1), dtype=jnp.float32,
        minval=-init_range, maxval=init_range)

    # One-time (init-time) table prep: cast + column-pad + fold in sqrt(d_model).
    table = prepare_index_text_encoder_table(weight, d_model)

    src = jax.random.randint(k_src, (seq_len, batch), 0, n_tokens, dtype=jnp.int32)
    out = index_text_encoder_forward(src, table, d_model)
    out = jax.block_until_ready(out)

    ref = jnp.take(weight, src, axis=0) * math.sqrt(d_model)
    assert out.shape == (seq_len, batch, d_model - 1)
    assert jnp.allclose(out, ref, atol=1e-6, rtol=1e-6)

    # Second check: n > block_tokens and n not a multiple of it (multi-block + tail path).
    seq2, batch2 = 37, 3
    src2 = jax.random.randint(k_src2, (seq2, batch2), 0, n_tokens, dtype=jnp.int32)
    out2 = jax.block_until_ready(
        index_text_encoder_forward(src2, table, d_model, block_tokens=64))
    ref2 = jnp.take(weight, src2, axis=0) * math.sqrt(d_model)
    assert out2.shape == (seq2, batch2, d_model - 1)
    assert jnp.allclose(out2, ref2, atol=1e-6, rtol=1e-6)

    print("KERNEL_OK")
</pallas_src>

<mosaic_0001>
module attributes {stable_mosaic.version = 11 : i64} {
  func.func @_embed_gather_kernel(%arg0: i32, %arg1: memref<32xi32, #tpu.memory_space<smem>>, %arg2: memref<50x32xf32, #tpu.memory_space<vmem>>, %arg3: memref<8x128xf32, #tpu.memory_space<vmem>>) attributes {dimension_semantics = [#tpu.dimension_semantics<parallel>], iteration_bounds = array<i64: 1>, scalar_prefetch = 1 : i64, scratch_operands = 0 : i64, tpu.core_type = #tpu.core_type<tc>, window_params = [{pipeline_mode = #tpu.pipeline_mode<synchronous>, transform_indices = @transform_0, window_bounds = array<i64: 50, 32>}, {transform_indices = @transform_1, window_bounds = array<i64: 8, 128>}]} {
    %c32_i32 = arith.constant 32 : i32
    %0 = arith.muli %arg0, %c32_i32 : i32
    %c0_i32 = arith.constant 0 : i32
    %c4_i32 = arith.constant 4 : i32
    %1 = arith.muli %c0_i32, %c4_i32 : i32
    %2 = arith.addi %0, %1 : i32
    %c0_i32_0 = arith.constant 0 : i32
    %3 = arith.addi %2, %c0_i32_0 : i32
    %4 = arith.index_cast %3 : i32 to index
    %5 = memref.load %arg1[%4] : memref<32xi32, #tpu.memory_space<smem>>
    %6 = arith.index_cast %5 : i32 to index
    %c0 = arith.constant 0 : index
    %7 = vector.load %arg2[%6, %c0] : memref<50x32xf32, #tpu.memory_space<vmem>>, vector<1x32xf32>
    %c4_i32_1 = arith.constant 4 : i32
    %8 = arith.muli %c0_i32, %c4_i32_1 : i32
    %9 = arith.addi %0, %8 : i32
    %c1_i32 = arith.constant 1 : i32
    %10 = arith.addi %9, %c1_i32 : i32
    %11 = arith.index_cast %10 : i32 to index
    %12 = memref.load %arg1[%11] : memref<32xi32, #tpu.memory_space<smem>>
    %13 = arith.index_cast %12 : i32 to index
    %c0_2 = arith.constant 0 : index
    %14 = vector.load %arg2[%13, %c0_2] : memref<50x32xf32, #tpu.memory_space<vmem>>, vector<1x32xf32>
    %c4_i32_3 = arith.constant 4 : i32
    %15 = arith.muli %c0_i32, %c4_i32_3 : i32
    %16 = arith.addi %0, %15 : i32
    %c2_i32 = arith.constant 2 : i32
    %17 = arith.addi %16, %c2_i32 : i32
    %18 = arith.index_cast %17 : i32 to index
    %19 = memref.load %arg1[%18] : memref<32xi32, #tpu.memory_space<smem>>
    %20 = arith.index_cast %19 : i32 to index
    %c0_4 = arith.constant 0 : index
    %21 = vector.load %arg2[%20, %c0_4] : memref<50x32xf32, #tpu.memory_space<vmem>>, vector<1x32xf32>
    %c4_i32_5 = arith.constant 4 : i32
    %22 = arith.muli %c0_i32, %c4_i32_5 : i32
    %23 = arith.addi %0, %22 : i32
    %c3_i32 = arith.constant 3 : i32
    %24 = arith.addi %23, %c3_i32 : i32
    %25 = arith.index_cast %24 : i32 to index
    %26 = memref.load %arg1[%25] : memref<32xi32, #tpu.memory_space<smem>>
    %27 = arith.index_cast %26 : i32 to index
    %c0_6 = arith.constant 0 : index
    %28 = vector.load %arg2[%27, %c0_6] : memref<50x32xf32, #tpu.memory_space<vmem>>, vector<1x32xf32>
    %29 = tpu.concatenate %7, %14, %21, %28 in 1 : vector<1x32xf32>, vector<1x32xf32>, vector<1x32xf32>, vector<1x32xf32> -> vector<1x128xf32>
    %30 = arith.index_cast %c0_i32 : i32 to index
    %c0_7 = arith.constant 0 : index
    %31 = vector.load %arg3[%30, %c0_7] : memref<8x128xf32, #tpu.memory_space<vmem>>, vector<1x128xf32>
    tpu.vector_store %arg3[%30, %c0_7], %29 {strides = array<i32>} : memref<8x128xf32, #tpu.memory_space<vmem>>, vector<1x128xf32>,
    %c1_i32_8 = arith.constant 1 : i32
    %c4_i32_9 = arith.constant 4 : i32
    %32 = arith.muli %c1_i32_8, %c4_i32_9 : i32
    %33 = arith.addi %0, %32 : i32
    %c0_i32_10 = arith.constant 0 : i32
    %34 = arith.addi %33, %c0_i32_10 : i32
    %35 = arith.index_cast %34 : i32 to index
    %36 = memref.load %arg1[%35] : memref<32xi32, #tpu.memory_space<smem>>
    %37 = arith.index_cast %36 : i32 to index
    %c0_11 = arith.constant 0 : index
    %38 = vector.load %arg2[%37, %c0_11] : memref<50x32xf32, #tpu.memory_space<vmem>>, vector<1x32xf32>
    %c4_i32_12 = arith.constant 4 : i32
    %39 = arith.muli %c1_i32_8, %c4_i32_12 : i32
    %40 = arith.addi %0, %39 : i32
    %c1_i32_13 = arith.constant 1 : i32
    %41 = arith.addi %40, %c1_i32_13 : i32
    %42 = arith.index_cast %41 : i32 to index
    %43 = memref.load %arg1[%42] : memref<32xi32, #tpu.memory_space<smem>>
    %44 = arith.index_cast %43 : i32 to index
    %c0_14 = arith.constant 0 : index
    %45 = vector.load %arg2[%44, %c0_14] : memref<50x32xf32, #tpu.memory_space<vmem>>, vector<1x32xf32>
    %c4_i32_15 = arith.constant 4 : i32
    %46 = arith.muli %c1_i32_8, %c4_i32_15 : i32
    %47 = arith.addi %0, %46 : i32
    %c2_i32_16 = arith.constant 2 : i32
    %48 = arith.addi %47, %c2_i32_16 : i32
    %49 = arith.index_cast %48 : i32 to index
    %50 = memref.load %arg1[%49] : memref<32xi32, #tpu.memory_space<smem>>
    %51 = arith.index_cast %50 : i32 to index
    %c0_17 = arith.constant 0 : index
    %52 = vector.load %arg2[%51, %c0_17] : memref<50x32xf32, #tpu.memory_space<vmem>>, vector<1x32xf32>
    %c4_i32_18 = arith.constant 4 : i32
    %53 = arith.muli %c1_i32_8, %c4_i32_18 : i32
    %54 = arith.addi %0, %53 : i32
    %c3_i32_19 = arith.constant 3 : i32
    %55 = arith.addi %54, %c3_i32_19 : i32
    %56 = arith.index_cast %55 : i32 to index
    %57 = memref.load %arg1[%56] : memref<32xi32, #tpu.memory_space<smem>>
    %58 = arith.index_cast %57 : i32 to index
    %c0_20 = arith.constant 0 : index
    %59 = vector.load %arg2[%58, %c0_20] : memref<50x32xf32, #tpu.memory_space<vmem>>, vector<1x32xf32>
    %60 = tpu.concatenate %38, %45, %52, %59 in 1 : vector<1x32xf32>, vector<1x32xf32>, vector<1x32xf32>, vector<1x32xf32> -> vector<1x128xf32>
    %61 = arith.index_cast %c1_i32_8 : i32 to index
    %c0_21 = arith.constant 0 : index
    %62 = vector.load %arg3[%61, %c0_21] : memref<8x128xf32, #tpu.memory_space<vmem>>, vector<1x128xf32>
    tpu.vector_store %arg3[%61, %c0_21], %60 {strides = array<i32>} : memref<8x128xf32, #tpu.memory_space<vmem>>, vector<1x128xf32>,
    %c2_i32_22 = arith.constant 2 : i32
    %c4_i32_23 = arith.constant 4 : i32
    %63 = arith.muli %c2_i32_22, %c4_i32_23 : i32
    %64 = arith.addi %0, %63 : i32
    %c0_i32_24 = arith.constant 0 : i32
    %65 = arith.addi %64, %c0_i32_24 : i32
    %66 = arith.index_cast %65 : i32 to index
    %67 = memref.load %arg1[%66] : memref<32xi32, #tpu.memory_space<smem>>
    %68 = arith.index_cast %67 : i32 to index
    %c0_25 = arith.constant 0 : index
    %69 = vector.load %arg2[%68, %c0_25] : memref<50x32xf32, #tpu.memory_space<vmem>>, vector<1x32xf32>
    %c4_i32_26 = arith.constant 4 : i32
    %70 = arith.muli %c2_i32_22, %c4_i32_26 : i32
    %71 = arith.addi %0, %70 : i32
    %c1_i32_27 = arith.constant 1 : i32
    %72 = arith.addi %71, %c1_i32_27 : i32
    %73 = arith.index_cast %72 : i32 to index
    %74 = memref.load %arg1[%73] : memref<32xi32, #tpu.memory_space<smem>>
    %75 = arith.index_cast %74 : i32 to index
    %c0_28 = arith.constant 0 : index
    %76 = vector.load %arg2[%75, %c0_28] : memref<50x32xf32, #tpu.memory_space<vmem>>, vector<1x32xf32>
    %c4_i32_29 = arith.constant 4 : i32
    %77 = arith.muli %c2_i32_22, %c4_i32_29 : i32
    %78 = arith.addi %0, %77 : i32
    %c2_i32_30 = arith.constant 2 : i32
    %79 = arith.addi %78, %c2_i32_30 : i32
    %80 = arith.index_cast %79 : i32 to index
    %81 = memref.load %arg1[%80] : memref<32xi32, #tpu.memory_space<smem>>
    %82 = arith.index_cast %81 : i32 to index
    %c0_31 = arith.constant 0 : index
    %83 = vector.load %arg2[%82, %c0_31] : memref<50x32xf32, #tpu.memory_space<vmem>>, vector<1x32xf32>
    %c4_i32_32 = arith.constant 4 : i32
    %84 = arith.muli %c2_i32_22, %c4_i32_32 : i32
    %85 = arith.addi %0, %84 : i32
    %c3_i32_33 = arith.constant 3 : i32
    %86 = arith.addi %85, %c3_i32_33 : i32
    %87 = arith.index_cast %86 : i32 to index
    %88 = memref.load %arg1[%87] : memref<32xi32, #tpu.memory_space<smem>>
    %89 = arith.index_cast %88 : i32 to index
    %c0_34 = arith.constant 0 : index
    %90 = vector.load %arg2[%89, %c0_34] : memref<50x32xf32, #tpu.memory_space<vmem>>, vector<1x32xf32>
    %91 = tpu.concatenate %69, %76, %83, %90 in 1 : vector<1x32xf32>, vector<1x32xf32>, vector<1x32xf32>, vector<1x32xf32> -> vector<1x128xf32>
    %92 = arith.index_cast %c2_i32_22 : i32 to index
    %c0_35 = arith.constant 0 : index
    %93 = vector.load %arg3[%92, %c0_35] : memref<8x128xf32, #tpu.memory_space<vmem>>, vector<1x128xf32>
    tpu.vector_store %arg3[%92, %c0_35], %91 {strides = array<i32>} : memref<8x128xf32, #tpu.memory_space<vmem>>, vector<1x128xf32>,
    %c3_i32_36 = arith.constant 3 : i32
    %c4_i32_37 = arith.constant 4 : i32
    %94 = arith.muli %c3_i32_36, %c4_i32_37 : i32
    %95 = arith.addi %0, %94 : i32
    %c0_i32_38 = arith.constant 0 : i32
    %96 = arith.addi %95, %c0_i32_38 : i32
    %97 = arith.index_cast %96 : i32 to index
    %98 = memref.load %arg1[%97] : memref<32xi32, #tpu.memory_space<smem>>
    %99 = arith.index_cast %98 : i32 to index
    %c0_39 = arith.constant 0 : index
    %100 = vector.load %arg2[%99, %c0_39] : memref<50x32xf32, #tpu.memory_space<vmem>>, vector<1x32xf32>
    %c4_i32_40 = arith.constant 4 : i32
    %101 = arith.muli %c3_i32_36, %c4_i32_40 : i32
    %102 = arith.addi %0, %101 : i32
    %c1_i32_41 = arith.constant 1 : i32
    %103 = arith.addi %102, %c1_i32_41 : i32
    %104 = arith.index_cast %103 : i32 to index
    %105 = memref.load %arg1[%104] : memref<32xi32, #tpu.memory_space<smem>>
    %106 = arith.index_cast %105 : i32 to index
    %c0_42 = arith.constant 0 : index
    %107 = vector.load %arg2[%106, %c0_42] : memref<50x32xf32, #tpu.memory_space<vmem>>, vector<1x32xf32>
    %c4_i32_43 = arith.constant 4 : i32
    %108 = arith.muli %c3_i32_36, %c4_i32_43 : i32
    %109 = arith.addi %0, %108 : i32
    %c2_i32_44 = arith.constant 2 : i32
    %110 = arith.addi %109, %c2_i32_44 : i32
    %111 = arith.index_cast %110 : i32 to index
    %112 = memref.load %arg1[%111] : memref<32xi32, #tpu.memory_space<smem>>
    %113 = arith.index_cast %112 : i32 to index
    %c0_45 = arith.constant 0 : index
    %114 = vector.load %arg2[%113, %c0_45] : memref<50x32xf32, #tpu.memory_space<vmem>>, vector<1x32xf32>
    %c4_i32_46 = arith.constant 4 : i32
    %115 = arith.muli %c3_i32_36, %c4_i32_46 : i32
    %116 = arith.addi %0, %115 : i32
    %c3_i32_47 = arith.constant 3 : i32
    %117 = arith.addi %116, %c3_i32_47 : i32
    %118 = arith.index_cast %117 : i32 to index
    %119 = memref.load %arg1[%118] : memref<32xi32, #tpu.memory_space<smem>>
    %120 = arith.index_cast %119 : i32 to index
    %c0_48 = arith.constant 0 : index
    %121 = vector.load %arg2[%120, %c0_48] : memref<50x32xf32, #tpu.memory_space<vmem>>, vector<1x32xf32>
    %122 = tpu.concatenate %100, %107, %114, %121 in 1 : vector<1x32xf32>, vector<1x32xf32>, vector<1x32xf32>, vector<1x32xf32> -> vector<1x128xf32>
    %123 = arith.index_cast %c3_i32_36 : i32 to index
    %c0_49 = arith.constant 0 : index
    %124 = vector.load %arg3[%123, %c0_49] : memref<8x128xf32, #tpu.memory_space<vmem>>, vector<1x128xf32>
    tpu.vector_store %arg3[%123, %c0_49], %122 {strides = array<i32>} : memref<8x128xf32, #tpu.memory_space<vmem>>, vector<1x128xf32>,
    %c4_i32_50 = arith.constant 4 : i32
    %c4_i32_51 = arith.constant 4 : i32
    %125 = arith.muli %c4_i32_50, %c4_i32_51 : i32
    %126 = arith.addi %0, %125 : i32
    %c0_i32_52 = arith.constant 0 : i32
    %127 = arith.addi %126, %c0_i32_52 : i32
    %128 = arith.index_cast %127 : i32 to index
    %129 = memref.load %arg1[%128] : memref<32xi32, #tpu.memory_space<smem>>
    %130 = arith.index_cast %129 : i32 to index
    %c0_53 = arith.constant 0 : index
    %131 = vector.load %arg2[%130, %c0_53] : memref<50x32xf32, #tpu.memory_space<vmem>>, vector<1x32xf32>
    %c4_i32_54 = arith.constant 4 : i32
    %132 = arith.muli %c4_i32_50, %c4_i32_54 : i32
    %133 = arith.addi %0, %132 : i32
    %c1_i32_55 = arith.constant 1 : i32
    %134 = arith.addi %133, %c1_i32_55 : i32
    %135 = arith.index_cast %134 : i32 to index
    %136 = memref.load %arg1[%135] : memref<32xi32, #tpu.memory_space<smem>>
    %137 = arith.index_cast %136 : i32 to index
    %c0_56 = arith.constant 0 : index
    %138 = vector.load %arg2[%137, %c0_56] : memref<50x32xf32, #tpu.memory_space<vmem>>, vector<1x32xf32>
    %c4_i32_57 = arith.constant 4 : i32
    %139 = arith.muli %c4_i32_50, %c4_i32_57 : i32
    %140 = arith.addi %0, %139 : i32
    %c2_i32_58 = arith.constant 2 : i32
    %141 = arith.addi %140, %c2_i32_58 : i32
    %142 = arith.index_cast %141 : i32 to index
    %143 = memref.load %arg1[%142] : memref<32xi32, #tpu.memory_space<smem>>
    %144 = arith.index_cast %143 : i32 to index
    %c0_59 = arith.constant 0 : index
    %145 = vector.load %arg2[%144, %c0_59] : memref<50x32xf32, #tpu.memory_space<vmem>>, vector<1x32xf32>
    %c4_i32_60 = arith.constant 4 : i32
    %146 = arith.muli %c4_i32_50, %c4_i32_60 : i32
    %147 = arith.addi %0, %146 : i32
    %c3_i32_61 = arith.constant 3 : i32
    %148 = arith.addi %147, %c3_i32_61 : i32
    %149 = arith.index_cast %148 : i32 to index
    %150 = memref.load %arg1[%149] : memref<32xi32, #tpu.memory_space<smem>>
    %151 = arith.index_cast %150 : i32 to index
    %c0_62 = arith.constant 0 : index
    %152 = vector.load %arg2[%151, %c0_62] : memref<50x32xf32, #tpu.memory_space<vmem>>, vector<1x32xf32>
    %153 = tpu.concatenate %131, %138, %145, %152 in 1 : vector<1x32xf32>, vector<1x32xf32>, vector<1x32xf32>, vector<1x32xf32> -> vector<1x128xf32>
    %154 = arith.index_cast %c4_i32_50 : i32 to index
    %c0_63 = arith.constant 0 : index
    %155 = vector.load %arg3[%154, %c0_63] : memref<8x128xf32, #tpu.memory_space<vmem>>, vector<1x128xf32>
    tpu.vector_store %arg3[%154, %c0_63], %153 {strides = array<i32>} : memref<8x128xf32, #tpu.memory_space<vmem>>, vector<1x128xf32>,
    %c5_i32 = arith.constant 5 : i32
    %c4_i32_64 = arith.constant 4 : i32
    %156 = arith.muli %c5_i32, %c4_i32_64 : i32
    %157 = arith.addi %0, %156 : i32
    %c0_i32_65 = arith.constant 0 : i32
    %158 = arith.addi %157, %c0_i32_65 : i32
    %159 = arith.index_cast %158 : i32 to index
    %160 = memref.load %arg1[%159] : memref<32xi32, #tpu.memory_space<smem>>
    %161 = arith.index_cast %160 : i32 to index
    %c0_66 = arith.constant 0 : index
    %162 = vector.load %arg2[%161, %c0_66] : memref<50x32xf32, #tpu.memory_space<vmem>>, vector<1x32xf32>
    %c4_i32_67 = arith.constant 4 : i32
    %163 = arith.muli %c5_i32, %c4_i32_67 : i32
    %164 = arith.addi %0, %163 : i32
    %c1_i32_68 = arith.constant 1 : i32
    %165 = arith.addi %164, %c1_i32_68 : i32
    %166 = arith.index_cast %165 : i32 to index
    %167 = memref.load %arg1[%166] : memref<32xi32, #tpu.memory_space<smem>>
    %168 = arith.index_cast %167 : i32 to index
    %c0_69 = arith.constant 0 : index
    %169 = vector.load %arg2[%168, %c0_69] : memref<50x32xf32, #tpu.memory_space<vmem>>, vector<1x32xf32>
    %c4_i32_70 = arith.constant 4 : i32
    %170 = arith.muli %c5_i32, %c4_i32_70 : i32
    %171 = arith.addi %0, %170 : i32
    %c2_i32_71 = arith.constant 2 : i32
    %172 = arith.addi %171, %c2_i32_71 : i32
    %173 = arith.index_cast %172 : i32 to index
    %174 = memref.load %arg1[%173] : memref<32xi32, #tpu.memory_space<smem>>
    %175 = arith.index_cast %174 : i32 to index
    %c0_72 = arith.constant 0 : index
    %176 = vector.load %arg2[%175, %c0_72] : memref<50x32xf32, #tpu.memory_space<vmem>>, vector<1x32xf32>
    %c4_i32_73 = arith.constant 4 : i32
    %177 = arith.muli %c5_i32, %c4_i32_73 : i32
    %178 = arith.addi %0, %177 : i32
    %c3_i32_74 = arith.constant 3 : i32
    %179 = arith.addi %178, %c3_i32_74 : i32
    %180 = arith.index_cast %179 : i32 to index
    %181 = memref.load %arg1[%180] : memref<32xi32, #tpu.memory_space<smem>>
    %182 = arith.index_cast %181 : i32 to index
    %c0_75 = arith.constant 0 : index
    %183 = vector.load %arg2[%182, %c0_75] : memref<50x32xf32, #tpu.memory_space<vmem>>, vector<1x32xf32>
    %184 = tpu.concatenate %162, %169, %176, %183 in 1 : vector<1x32xf32>, vector<1x32xf32>, vector<1x32xf32>, vector<1x32xf32> -> vector<1x128xf32>
    %185 = arith.index_cast %c5_i32 : i32 to index
    %c0_76 = arith.constant 0 : index
    %186 = vector.load %arg3[%185, %c0_76] : memref<8x128xf32, #tpu.memory_space<vmem>>, vector<1x128xf32>
    tpu.vector_store %arg3[%185, %c0_76], %184 {strides = array<i32>} : memref<8x128xf32, #tpu.memory_space<vmem>>, vector<1x128xf32>,
    %c6_i32 = arith.constant 6 : i32
    %c4_i32_77 = arith.constant 4 : i32
    %187 = arith.muli %c6_i32, %c4_i32_77 : i32
    %188 = arith.addi %0, %187 : i32
    %c0_i32_78 = arith.constant 0 : i32
    %189 = arith.addi %188, %c0_i32_78 : i32
    %190 = arith.index_cast %189 : i32 to index
    %191 = memref.load %arg1[%190] : memref<32xi32, #tpu.memory_space<smem>>
    %192 = arith.index_cast %191 : i32 to index
    %c0_79 = arith.constant 0 : index
    %193 = vector.load %arg2[%192, %c0_79] : memref<50x32xf32, #tpu.memory_space<vmem>>, vector<1x32xf32>
    %c4_i32_80 = arith.constant 4 : i32
    %194 = arith.muli %c6_i32, %c4_i32_80 : i32
    %195 = arith.addi %0, %194 : i32
    %c1_i32_81 = arith.constant 1 : i32
    %196 = arith.addi %195, %c1_i32_81 : i32
    %197 = arith.index_cast %196 : i32 to index
    %198 = memref.load %arg1[%197] : memref<32xi32, #tpu.memory_space<smem>>
    %199 = arith.index_cast %198 : i32 to index
    %c0_82 = arith.constant 0 : index
    %200 = vector.load %arg2[%199, %c0_82] : memref<50x32xf32, #tpu.memory_space<vmem>>, vector<1x32xf32>
    %c4_i32_83 = arith.constant 4 : i32
    %201 = arith.muli %c6_i32, %c4_i32_83 : i32
    %202 = arith.addi %0, %201 : i32
    %c2_i32_84 = arith.constant 2 : i32
    %203 = arith.addi %202, %c2_i32_84 : i32
    %204 = arith.index_cast %203 : i32 to index
    %205 = memref.load %arg1[%204] : memref<32xi32, #tpu.memory_space<smem>>
    %206 = arith.index_cast %205 : i32 to index
    %c0_85 = arith.constant 0 : index
    %207 = vector.load %arg2[%206, %c0_85] : memref<50x32xf32, #tpu.memory_space<vmem>>, vector<1x32xf32>
    %c4_i32_86 = arith.constant 4 : i32
    %208 = arith.muli %c6_i32, %c4_i32_86 : i32
    %209 = arith.addi %0, %208 : i32
    %c3_i32_87 = arith.constant 3 : i32
    %210 = arith.addi %209, %c3_i32_87 : i32
    %211 = arith.index_cast %210 : i32 to index
    %212 = memref.load %arg1[%211] : memref<32xi32, #tpu.memory_space<smem>>
    %213 = arith.index_cast %212 : i32 to index
    %c0_88 = arith.constant 0 : index
    %214 = vector.load %arg2[%213, %c0_88] : memref<50x32xf32, #tpu.memory_space<vmem>>, vector<1x32xf32>
    %215 = tpu.concatenate %193, %200, %207, %214 in 1 : vector<1x32xf32>, vector<1x32xf32>, vector<1x32xf32>, vector<1x32xf32> -> vector<1x128xf32>
    %216 = arith.index_cast %c6_i32 : i32 to index
    %c0_89 = arith.constant 0 : index
    %217 = vector.load %arg3[%216, %c0_89] : memref<8x128xf32, #tpu.memory_space<vmem>>, vector<1x128xf32>
    tpu.vector_store %arg3[%216, %c0_89], %215 {strides = array<i32>} : memref<8x128xf32, #tpu.memory_space<vmem>>, vector<1x128xf32>,
    %c7_i32 = arith.constant 7 : i32
    %c4_i32_90 = arith.constant 4 : i32
    %218 = arith.muli %c7_i32, %c4_i32_90 : i32
    %219 = arith.addi %0, %218 : i32
    %c0_i32_91 = arith.constant 0 : i32
    %220 = arith.addi %219, %c0_i32_91 : i32
    %221 = arith.index_cast %220 : i32 to index
    %222 = memref.load %arg1[%221] : memref<32xi32, #tpu.memory_space<smem>>
    %223 = arith.index_cast %222 : i32 to index
    %c0_92 = arith.constant 0 : index
    %224 = vector.load %arg2[%223, %c0_92] : memref<50x32xf32, #tpu.memory_space<vmem>>, vector<1x32xf32>
    %c4_i32_93 = arith.constant 4 : i32
    %225 = arith.muli %c7_i32, %c4_i32_93 : i32
    %226 = arith.addi %0, %225 : i32
    %c1_i32_94 = arith.constant 1 : i32
    %227 = arith.addi %226, %c1_i32_94 : i32
    %228 = arith.index_cast %227 : i32 to index
    %229 = memref.load %arg1[%228] : memref<32xi32, #tpu.memory_space<smem>>
    %230 = arith.index_cast %229 : i32 to index
    %c0_95 = arith.constant 0 : index
    %231 = vector.load %arg2[%230, %c0_95] : memref<50x32xf32, #tpu.memory_space<vmem>>, vector<1x32xf32>
    %c4_i32_96 = arith.constant 4 : i32
    %232 = arith.muli %c7_i32, %c4_i32_96 : i32
    %233 = arith.addi %0, %232 : i32
    %c2_i32_97 = arith.constant 2 : i32
    %234 = arith.addi %233, %c2_i32_97 : i32
    %235 = arith.index_cast %234 : i32 to index
    %236 = memref.load %arg1[%235] : memref<32xi32, #tpu.memory_space<smem>>
    %237 = arith.index_cast %236 : i32 to index
    %c0_98 = arith.constant 0 : index
    %238 = vector.load %arg2[%237, %c0_98] : memref<50x32xf32, #tpu.memory_space<vmem>>, vector<1x32xf32>
    %c4_i32_99 = arith.constant 4 : i32
    %239 = arith.muli %c7_i32, %c4_i32_99 : i32
    %240 = arith.addi %0, %239 : i32
    %c3_i32_100 = arith.constant 3 : i32
    %241 = arith.addi %240, %c3_i32_100 : i32
    %242 = arith.index_cast %241 : i32 to index
    %243 = memref.load %arg1[%242] : memref<32xi32, #tpu.memory_space<smem>>
    %244 = arith.index_cast %243 : i32 to index
    %c0_101 = arith.constant 0 : index
    %245 = vector.load %arg2[%244, %c0_101] : memref<50x32xf32, #tpu.memory_space<vmem>>, vector<1x32xf32>
    %246 = tpu.concatenate %224, %231, %238, %245 in 1 : vector<1x32xf32>, vector<1x32xf32>, vector<1x32xf32>, vector<1x32xf32> -> vector<1x128xf32>
    %247 = arith.index_cast %c7_i32 : i32 to index
    %c0_102 = arith.constant 0 : index
    %248 = vector.load %arg3[%247, %c0_102] : memref<8x128xf32, #tpu.memory_space<vmem>>, vector<1x128xf32>
    tpu.vector_store %arg3[%247, %c0_102], %246 {strides = array<i32>} : memref<8x128xf32, #tpu.memory_space<vmem>>, vector<1x128xf32>,
    %c8_i32 = arith.constant 8 : i32
    return
  }
  func.func @transform_0(%arg0: i32, %arg1: memref<32xi32, #tpu.memory_space<smem>>) -> (i32, i32) {
    %c0_i32 = arith.constant 0 : i32
    %c0_i32_0 = arith.constant 0 : i32
    %c0_i32_1 = arith.constant 0 : i32
    return %c0_i32, %c0_i32_0 : i32, i32
  }
  func.func @transform_1(%arg0: i32, %arg1: memref<32xi32, #tpu.memory_space<smem>>) -> (i32, i32) {
    %c0_i32 = arith.constant 0 : i32
    %c0_i32_0 = arith.constant 0 : i32
    return %arg0, %c0_i32 : i32, i32
  }
}

</mosaic_0001>

<llo_original>
// kernel: tpu_custom_call.1
$region0: #{tpu_custom_call.1}
  #allocation0 [shape = 'u32[]', space=smem, size = 0x4, offset = 0x4, fixed_abs, tag = 'smem constant byte address 0x4 - core index']
  #allocation1 [shape = 'u32[144,128]{1,0:T(1,128)}', space=vmem, size = 0x12000, scoped, tag = 'internal scratch']
  #allocation2 [shape = 's32[1]{0}', space=sflag, size = 0x4, scoped, tag = 'scoped memory for tpu_custom_call.1']
  #allocation3 [shape = 'u8[512]{0}', space=smem, size = 0x200, scoped, tag = 'prefetched SMEM operand 0']
  %s0 = inlined_call_operand.vmem [shape: s32[32], index: 0, kind: input, shape index: {}]
  %s1 = inlined_call_operand.vmem [shape: f32[50,32], index: 1, kind: input, shape index: {}]
  %s2 = inlined_call_operand.hbm [shape: f32[8,128], index: 2, kind: output, shape index: {}]
  %s3 = sld [smem:[#allocation0]]
  $region14: #{tpu_custom_call.1} parent=0
    _
  %s5 = ssub.s32 1, %s3
  %s6 = scalar_select 0, %s5, %s3
  %s7 = sshll.u32 %s0, 4
  %s8 = int_to_ptr.vmem [resolvable:$true] %s7
  %10 = dma.vmem_to_smem %s8, 16, [#allocation3], [#allocation2]
  %11 = dma.done [#allocation2], 16
  %12 = sfence
  $region1: #{tpu_custom_call.1} parent=0
    #allocation4 [shape = 'u8[4096]{0}', space=vmem, size = 0x1000, scoped, tag = 'output window, operand 0, single buffered']
    #allocation5 [shape = 's32[1]{0}', space=sflag, size = 0x4, scoped, tag = 'scoped memory for tpu_custom_call.1']
    %13 = vsyncpa [#allocation5], 0
    // Predicated region
    $region2: #{tpu_custom_call.1} parent=1 // pred_check
      _
    $region3: #{tpu_custom_call.1} parent=1 // pred_check_branch
      %15 = sbr.rel (0) target = $region5
    $region4: #{tpu_custom_call.1} parent=1 // pred_region
      _
    $region5: #{tpu_custom_call.1} parent=1 // pred_fallthru
      _
    %s16 = smul.u32 0, 32
    %s17 = sld [smem:[#allocation3 + %s16]]
    %s18 = scalar_lea.vmem %s1, %s17
    %v19 = vld [vmem:[%s18] sm:$0x1]
    %s20 = sadd.s32 %s16, 1
    %s21 = sld [smem:[#allocation3 + %s20]]
    %s22 = scalar_lea.vmem %s1, %s21
    %v23 = vld [vmem:[%s22] sm:$0x1]
    %s24 = sadd.s32 %s16, 2
    %s25 = sld [smem:[#allocation3 + %s24]]
    %s26 = scalar_lea.vmem %s1, %s25
    %v27 = vld [vmem:[%s26] sm:$0x1]
    %s28 = sadd.s32 %s16, 3
    %s29 = sld [smem:[#allocation3 + %s28]]
    %s30 = scalar_lea.vmem %s1, %s29
    %v31 = vld [vmem:[%s30] sm:$0x1]
    %33 = vrot.lane.b32.xlu0 %v23, 32
    %v34 = vpop.permute.xlu0 %33
    %37 = vrot.lane.b32.xlu0 %v27, 64
    %v38 = vpop.permute.xlu0 %37
    %41 = vrot.lane.b32.xlu0 %v31, 96
    %v42 = vpop.permute.xlu0 %41
    %vm44 = vcmask 261120
    %v45 = vsel %vm44, %v19, %v34
    %vm46 = vcmask 523264
    %v47 = vsel %vm46, %v45, %v38
    %vm48 = vcmask 785408
    %v49 = vsel %vm48, %v47, %v42
    %50 = vst [vmem:[#allocation4] sm:$0x1] %v49
    %s51 = sadd.s32 %s16, 4
    %s52 = sld [smem:[#allocation3 + %s51]]
    %s53 = scalar_lea.vmem %s1, %s52
    %v54 = vld [vmem:[%s53] sm:$0x1]
    %s55 = sadd.s32 %s16, 5
    %s56 = sld [smem:[#allocation3 + %s55]]
    %s57 = scalar_lea.vmem %s1, %s56
    %v58 = vld [vmem:[%s57] sm:$0x1]
    %s59 = sadd.s32 %s16, 6
    %s60 = sld [smem:[#allocation3 + %s59]]
    %s61 = scalar_lea.vmem %s1, %s60
    %v62 = vld [vmem:[%s61] sm:$0x1]
    %s63 = sadd.s32 %s16, 7
    %s64 = sld [smem:[#allocation3 + %s63]]
    %s65 = scalar_lea.vmem %s1, %s64
    %v66 = vld [vmem:[%s65] sm:$0x1]
    %68 = vrot.lane.b32.xlu0 %v58, 32
    %v69 = vpop.permute.xlu0 %68
    %72 = vrot.lane.b32.xlu0 %v62, 64
    %v73 = vpop.permute.xlu0 %72
    %76 = vrot.lane.b32.xlu0 %v66, 96
    %v77 = vpop.permute.xlu0 %76
    %v79 = vsel %vm44, %v54, %v69
    %v80 = vsel %vm46, %v79, %v73
    %v81 = vsel %vm48, %v80, %v77
    %82 = vst [vmem:[#allocation4 + $0x1] sm:$0x1] %v81
    %s83 = sadd.s32 %s16, 8
    %s84 = sld [smem:[#allocation3 + %s83]]
    %s85 = scalar_lea.vmem %s1, %s84
    %v86 = vld [vmem:[%s85] sm:$0x1]
    %s87 = sadd.s32 %s16, 9
    %s88 = sld [smem:[#allocation3 + %s87]]
    %s89 = scalar_lea.vmem %s1, %s88
    %v90 = vld [vmem:[%s89] sm:$0x1]
    %s91 = sadd.s32 %s16, 10
    %s92 = sld [smem:[#allocation3 + %s91]]
    %s93 = scalar_lea.vmem %s1, %s92
    %v94 = vld [vmem:[%s93] sm:$0x1]
    %s95 = sadd.s32 %s16, 11
    %s96 = sld [smem:[#allocation3 + %s95]]
    %s97 = scalar_lea.vmem %s1, %s96
    %v98 = vld [vmem:[%s97] sm:$0x1]
    %100 = vrot.lane.b32.xlu0 %v90, 32
    %v101 = vpop.permute.xlu0 %100
    %104 = vrot.lane.b32.xlu0 %v94, 64
    %v105 = vpop.permute.xlu0 %104
    %108 = vrot.lane.b32.xlu0 %v98, 96
    %v109 = vpop.permute.xlu0 %108
    %v111 = vsel %vm44, %v86, %v101
    %v112 = vsel %vm46, %v111, %v105
    %v113 = vsel %vm48, %v112, %v109
    %114 = vst [vmem:[#allocation4 + $0x2] sm:$0x1] %v113
    %s115 = sadd.s32 %s16, 12
    %s116 = sld [smem:[#allocation3 + %s115]]
    %s117 = scalar_lea.vmem %s1, %s116
    %v118 = vld [vmem:[%s117] sm:$0x1]
    %s119 = sadd.s32 %s16, 13
    %s120 = sld [smem:[#allocation3 + %s119]]
    %s121 = scalar_lea.vmem %s1, %s120
    %v122 = vld [vmem:[%s121] sm:$0x1]
    %s123 = sadd.s32 %s16, 14
    %s124 = sld [smem:[#allocation3 + %s123]]
    %s125 = scalar_lea.vmem %s1, %s124
    %v126 = vld [vmem:[%s125] sm:$0x1]
    %s127 = sadd.s32 %s16, 15
    %s128 = sld [smem:[#allocation3 + %s127]]
    %s129 = scalar_lea.vmem %s1, %s128
    %v130 = vld [vmem:[%s129] sm:$0x1]
    %132 = vrot.lane.b32.xlu0 %v122, 32
    %v133 = vpop.permute.xlu0 %132
    %136 = vrot.lane.b32.xlu0 %v126, 64
    %v137 = vpop.permute.xlu0 %136
    %140 = vrot.lane.b32.xlu0 %v130, 96
    %v141 = vpop.permute.xlu0 %140
    %v143 = vsel %vm44, %v118, %v133
    %v144 = vsel %vm46, %v143, %v137
    %v145 = vsel %vm48, %v144, %v141
    %146 = vst [vmem:[#allocation4 + $0x3] sm:$0x1] %v145
    %s147 = sadd.s32 %s16, 16
    %s148 = sld [smem:[#allocation3 + %s147]]
    %s149 = scalar_lea.vmem %s1, %s148
    %v150 = vld [vmem:[%s149] sm:$0x1]
    %s151 = sadd.s32 %s16, 17
    %s152 = sld [smem:[#allocation3 + %s151]]
    %s153 = scalar_lea.vmem %s1, %s152
    %v154 = vld [vmem:[%s153] sm:$0x1]
    %s155 = sadd.s32 %s16, 18
    %s156 = sld [smem:[#allocation3 + %s155]]
    %s157 = scalar_lea.vmem %s1, %s156
    %v158 = vld [vmem:[%s157] sm:$0x1]
    %s159 = sadd.s32 %s16, 19
    %s160 = sld [smem:[#allocation3 + %s159]]
    %s161 = scalar_lea.vmem %s1, %s160
    %v162 = vld [vmem:[%s161] sm:$0x1]
    %164 = vrot.lane.b32.xlu0 %v154, 32
    %v165 = vpop.permute.xlu0 %164
    %168 = vrot.lane.b32.xlu0 %v158, 64
    %v169 = vpop.permute.xlu0 %168
    %172 = vrot.lane.b32.xlu0 %v162, 96
    %v173 = vpop.permute.xlu0 %172
    %v175 = vsel %vm44, %v150, %v165
    %v176 = vsel %vm46, %v175, %v169
    %v177 = vsel %vm48, %v176, %v173
    %178 = vst [vmem:[#allocation4 + $0x4] sm:$0x1] %v177
    %s179 = sadd.s32 %s16, 20
    %s180 = sld [smem:[#allocation3 + %s179]]
    %s181 = scalar_lea.vmem %s1, %s180
    %v182 = vld [vmem:[%s181] sm:$0x1]
    %s183 = sadd.s32 %s16, 21
    %s184 = sld [smem:[#allocation3 + %s183]]
    %s185 = scalar_lea.vmem %s1, %s184
    %v186 = vld [vmem:[%s185] sm:$0x1]
    %s187 = sadd.s32 %s16, 22
    %s188 = sld [smem:[#allocation3 + %s187]]
    %s189 = scalar_lea.vmem %s1, %s188
    %v190 = vld [vmem:[%s189] sm:$0x1]
    %s191 = sadd.s32 %s16, 23
    %s192 = sld [smem:[#allocation3 + %s191]]
    %s193 = scalar_lea.vmem %s1, %s192
    %v194 = vld [vmem:[%s193] sm:$0x1]
    %196 = vrot.lane.b32.xlu0 %v186, 32
    %v197 = vpop.permute.xlu0 %196
    %200 = vrot.lane.b32.xlu0 %v190, 64
    %v201 = vpop.permute.xlu0 %200
    %204 = vrot.lane.b32.xlu0 %v194, 96
    %v205 = vpop.permute.xlu0 %204
    %v207 = vsel %vm44, %v182, %v197
    %v208 = vsel %vm46, %v207, %v201
    %v209 = vsel %vm48, %v208, %v205
    %210 = vst [vmem:[#allocation4 + $0x5] sm:$0x1] %v209
    %s211 = sadd.s32 %s16, 24
    %s212 = sld [smem:[#allocation3 + %s211]]
    %s213 = scalar_lea.vmem %s1, %s212
    %v214 = vld [vmem:[%s213] sm:$0x1]
    %s215 = sadd.s32 %s16, 25
    %s216 = sld [smem:[#allocation3 + %s215]]
    %s217 = scalar_lea.vmem %s1, %s216
    %v218 = vld [vmem:[%s217] sm:$0x1]
    %s219 = sadd.s32 %s16, 26
    %s220 = sld [smem:[#allocation3 + %s219]]
    %s221 = scalar_lea.vmem %s1, %s220
    %v222 = vld [vmem:[%s221] sm:$0x1]
    %s223 = sadd.s32 %s16, 27
    %s224 = sld [smem:[#allocation3 + %s223]]
    %s225 = scalar_lea.vmem %s1, %s224
    %v226 = vld [vmem:[%s225] sm:$0x1]
    %228 = vrot.lane.b32.xlu0 %v218, 32
    %v229 = vpop.permute.xlu0 %228
    %232 = vrot.lane.b32.xlu0 %v222, 64
    %v233 = vpop.permute.xlu0 %232
    %236 = vrot.lane.b32.xlu0 %v226, 96
    %v237 = vpop.permute.xlu0 %236
    %v239 = vsel %vm44, %v214, %v229
    %v240 = vsel %vm46, %v239, %v233
    %v241 = vsel %vm48, %v240, %v237
    %242 = vst [vmem:[#allocation4 + $0x6] sm:$0x1] %v241
    %s243 = sadd.s32 %s16, 28
    %s244 = sld [smem:[#allocation3 + %s243]]
    %s245 = scalar_lea.vmem %s1, %s244
    %v246 = vld [vmem:[%s245] sm:$0x1]
    %s247 = sadd.s32 %s16, 29
    %s248 = sld [smem:[#allocation3 + %s247]]
    %s249 = scalar_lea.vmem %s1, %s248
    %v250 = vld [vmem:[%s249] sm:$0x1]
    %s251 = sadd.s32 %s16, 30
    %s252 = sld [smem:[#allocation3 + %s251]]
    %s253 = scalar_lea.vmem %s1, %s252
    %v254 = vld [vmem:[%s253] sm:$0x1]
    %s255 = sadd.s32 %s16, 31
    %s256 = sld [smem:[#allocation3 + %s255]]
    %s257 = scalar_lea.vmem %s1, %s256
    %v258 = vld [vmem:[%s257] sm:$0x1]
    %260 = vrot.lane.b32.xlu0 %v250, 32
    %v261 = vpop.permute.xlu0 %260
    %264 = vrot.lane.b32.xlu0 %v254, 64
    %v265 = vpop.permute.xlu0 %264
    %268 = vrot.lane.b32.xlu0 %v258, 96
    %v269 = vpop.permute.xlu0 %268
    %v271 = vsel %vm44, %v246, %v261
    %v272 = vsel %vm46, %v271, %v265
    %v273 = vsel %vm48, %v272, %v269
    %274 = vst [vmem:[#allocation4 + $0x7] sm:$0x1] %v273
    // Predicated region
    $region6: #{tpu_custom_call.1} parent=1 // pred_check
      _
    $region7: #{tpu_custom_call.1} parent=1 // pred_check_branch
      %276 = sbr.rel (0) target = $region9
    $region8: #{tpu_custom_call.1} parent=1 // pred_region
      %s278 = ssub.s32 128, 128
      %279 = vsyncadd [#allocation5], %s278
      %s281 = sshll.u32 [#allocation4], 4
      %s282 = int_to_ptr.vmem [resolvable:$true] %s281
      %284 = dma.vmem_to_hbm [thread:$0]  %s282, 128, %s2, [#allocation5]
    $region9: #{tpu_custom_call.1} parent=1 // pred_fallthru
      _
    // Predicated region
    $region10: #{tpu_custom_call.1} parent=1 // pred_check
      _
    $region11: #{tpu_custom_call.1} parent=1 // pred_check_branch
      %286 = sbr.rel (0) target = $region13
    $region12: #{tpu_custom_call.1} parent=1 // pred_region
      %287 = dma.done [#allocation5], 128
    $region13: #{tpu_custom_call.1} parent=1 // pred_fallthru
      _
    %288 = vsyncpa [#allocation5], 1

</llo_original>
